<compile_context>
chip_gen: v7x
topology: tpu7x:2x2x1
jax: 0.10.0
libtpu: 0.0.40
codegen_flags: <defaults>
</compile_context>

<pallas_src>
import math
from functools import partial

import jax
import jax.numpy as jnp
from jax.experimental import pallas as pl
from jax.experimental.pallas import tpu as pltpu


_VMEM_CAP = 40 * 1024 * 1024     # conservative: below v7x's 64 MiB physical VMEM
_NEG_INF = float("-inf")


def _round_up(x, m):
    return ((x + m - 1) // m) * m


# ---------------------------------------------------------------------------
# Linear kernels:  y = x @ W + b
# ---------------------------------------------------------------------------
def _linear_ws_kernel(x_ref, w_ref, b_ref, o_ref):
    # Weight-stationary: the full (K, N) weight stays resident in VMEM (its
    # block index is constant across the grid), so W/b are DMA'd once and the
    # kernel is MXU-bound rather than DMA-bound.
    acc = jnp.dot(x_ref[...], w_ref[...], preferred_element_type=jnp.float32)
    o_ref[...] = (acc + b_ref[...].astype(jnp.float32)).astype(o_ref.dtype)


def _linear_tiled_kernel(x_ref, w_ref, b_ref, o_ref, acc_ref):
    k = pl.program_id(2)
    prod = jnp.dot(x_ref[...], w_ref[...], preferred_element_type=jnp.float32)

    @pl.when(k == 0)
    def _():                      # first K step writes directly (no zero+add)
        acc_ref[...] = prod

    @pl.when(k > 0)
    def _():
        acc_ref[...] += prod

    @pl.when(k == pl.num_programs(2) - 1)
    def _():
        o_ref[...] = (acc_ref[...] + b_ref[...].astype(jnp.float32)).astype(o_ref.dtype)


def pallas_linear(x, w, b, *, out_dtype=None, tm=512, tn=512, tk=512):
    """x: (M, K), w: (K, N), b: (N,) -> (M, N) in `out_dtype`."""
    M, K = x.shape
    Kw, N = w.shape
    assert K == Kw
    out_dtype = jnp.dtype(out_dtype) if out_dtype is not None else x.dtype

    # ---- weight-stationary fast path (projection-sized weights) -------------
    tm_ws = M if M <= tm else tm
    ws_bytes = (2 * K * N * w.dtype.itemsize            # weight (2 bufs worst case)
                + 2 * tm_ws * K * x.dtype.itemsize      # x double buffer
                + 2 * tm_ws * N * out_dtype.itemsize    # out double buffer
                + 2 * N * 4)                            # bias
    if ws_bytes <= _VMEM_CAP:
        M_pad = M if M <= tm else _round_up(M, tm)
        xp = x if M_pad == M else jnp.pad(x, ((0, M_pad - M), (0, 0)))
        out = pl.pallas_call(
            _linear_ws_kernel,
            out_shape=jax.ShapeDtypeStruct((M_pad, N), out_dtype),
            grid=(M_pad // tm_ws,),
            in_specs=[
                pl.BlockSpec((tm_ws, K), lambda i: (i, 0)),
                pl.BlockSpec((K, N), lambda i: (0, 0)),      # resident weight
                pl.BlockSpec((1, N), lambda i: (0, 0)),      # resident bias
            ],
            out_specs=pl.BlockSpec((tm_ws, N), lambda i: (i, 0)),
            compiler_params=pltpu.CompilerParams(
                dimension_semantics=("parallel",),
                vmem_limit_bytes=_VMEM_CAP),
        )(xp, w, b.reshape(1, N))
        return out if M_pad == M else out[:M]

    # ---- tiled fallback for large weights: grid (M, N, K), reduction last ---
    def tile(dim, target):
        t = min(target, _round_up(dim, 128))
        return t, _round_up(dim, t)

    tm_t, M_pad = tile(M, tm)
    tn_t, N_pad = tile(N, tn)
    tk_t, K_pad = tile(K, tk)
    xp = jnp.pad(x, ((0, M_pad - M), (0, K_pad - K)))
    wp = jnp.pad(w, ((0, K_pad - K), (0, N_pad - N)))
    bp = jnp.pad(b, (0, N_pad - N)).reshape(1, N_pad)

    out = pl.pallas_call(
        _linear_tiled_kernel,
        out_shape=jax.ShapeDtypeStruct((M_pad, N_pad), out_dtype),
        grid=(M_pad // tm_t, N_pad // tn_t, K_pad // tk_t),
        in_specs=[
            pl.BlockSpec((tm_t, tk_t), lambda i, j, k: (i, k)),
            pl.BlockSpec((tk_t, tn_t), lambda i, j, k: (k, j)),
            pl.BlockSpec((1, tn_t), lambda i, j, k: (0, j)),
        ],
        out_specs=pl.BlockSpec((tm_t, tn_t), lambda i, j, k: (i, j)),
        scratch_shapes=[pltpu.VMEM((tm_t, tn_t), jnp.float32)],
        compiler_params=pltpu.CompilerParams(
            dimension_semantics=("parallel", "parallel", "arbitrary"),
            vmem_limit_bytes=_VMEM_CAP),
    )(xp, wp, bp)
    return out[:M, :N]


# ---------------------------------------------------------------------------
# Flash-style multi-head attention over lane-dense (B, S, E) blocks.
#   grid = (B, Lq//tq, Lk//tk); heads are static lane slices of E = H*D.
#   Q arrives pre-scaled by 1/sqrt(D) (folded into the projection weights).
# ---------------------------------------------------------------------------
def _flash_mha_kernel(q_ref, k_ref, v_ref, o_ref, m_sc, l_sc, acc_sc,
                      *, num_heads, head_dim, kv_len, tk, masked):
    ki = pl.program_id(2)
    H, D = num_heads, head_dim

    @pl.when(ki == 0)
    def _():
        m_sc[...] = jnp.full_like(m_sc, _NEG_INF)
        l_sc[...] = jnp.zeros_like(l_sc)
        acc_sc[...] = jnp.zeros_like(acc_sc)

    if masked:  # static flag: only when Lk was padded to a tile multiple
        col = ki * tk + jax.lax.broadcasted_iota(jnp.int32, (1, tk), 1)
        col_ok = col < kv_len

    # Per-head operands are sliced straight from the refs — no per-ki scaling,
    # no whole-tile casts, no (tq, E)-sized temporaries.
    for h in range(H):
        sl = slice(h * D, (h + 1) * D)
        qh = q_ref[0, :, sl]                               # (tq, D)
        kh = k_ref[0, :, sl]                               # (tk, D)
        vh = v_ref[0, :, sl]                               # (tk, D)

        # Contract on D of both operands: no explicit K transpose.
        s = jax.lax.dot_general(qh, kh, (((1,), (1,)), ((), ())),
                                preferred_element_type=jnp.float32)   # (tq, tk)
        if masked:
            s = jnp.where(col_ok, s, _NEG_INF)

        m_prev = m_sc[:, h:h + 1]                          # (tq, 1)
        m_new = jnp.maximum(m_prev, jnp.max(s, axis=-1, keepdims=True))
        alpha = jnp.exp(m_prev - m_new)
        p = jnp.exp(s - m_new)                             # (tq, tk)

        l_sc[:, h:h + 1] = alpha * l_sc[:, h:h + 1] + jnp.sum(p, axis=-1,
                                                              keepdims=True)
        acc_sc[h] = alpha * acc_sc[h] + jnp.dot(
            p.astype(vh.dtype), vh, preferred_element_type=jnp.float32)
        m_sc[:, h:h + 1] = m_new

    @pl.when(ki == pl.num_programs(2) - 1)
    def _():
        parts = []
        for h in range(H):
            # One reciprocal per (head, row) applied to the (tq, D) accumulator.
            # (approx=False to match the f32 reference; use approx=True for bf16.)
            inv_l = pl.reciprocal(l_sc[:, h:h + 1], approx=False)
            parts.append(acc_sc[h] * inv_l)
        # Single lane-dense (tq, E) store instead of H width-D partial stores.
        o_ref[0] = jnp.concatenate(parts, axis=-1).astype(o_ref.dtype)


def _seq_tile(length, target):
    """Return (tile, padded_len) with tile dividing padded_len and either
    tile % 128 == 0 or tile == padded_len (satisfies the (8,128) rule)."""
    if length <= target:
        return length, length
    t = target
    while t >= 128:
        if length % t == 0:
            return t, length
        t //= 2
    return target, _round_up(length, target)     # pad + mask inside the kernel


def pallas_flash_mha(q, k, v, num_heads, *, tq=256, tk=256):
    """q: (B, Lq, E), k/v: (B, Lk, E) with heads packed in E -> (B, Lq, E)."""
    B, Lq, E = q.shape
    Lk = k.shape[1]
    D = E // num_heads

    tq_e, Lq_pad = _seq_tile(Lq, tq)
    tk_e, Lk_pad = _seq_tile(Lk, tk)
    masked = Lk_pad != Lk

    if Lq_pad != Lq:
        q = jnp.pad(q, ((0, 0), (0, Lq_pad - Lq), (0, 0)))
    if masked:
        k = jnp.pad(k, ((0, 0), (0, Lk_pad - Lk), (0, 0)))
        v = jnp.pad(v, ((0, 0), (0, Lk_pad - Lk), (0, 0)))

    q_spec = pl.BlockSpec((1, tq_e, E), lambda b, qi, ki: (b, qi, 0))
    kv_spec = pl.BlockSpec((1, tk_e, E), lambda b, qi, ki: (b, ki, 0))

    out = pl.pallas_call(
        partial(_flash_mha_kernel, num_heads=num_heads, head_dim=D,
                kv_len=Lk, tk=tk_e, masked=masked),
        out_shape=jax.ShapeDtypeStruct((B, Lq_pad, E), q.dtype),
        grid=(B, Lq_pad // tq_e, Lk_pad // tk_e),
        in_specs=[q_spec, kv_spec, kv_spec],
        out_specs=q_spec,
        scratch_shapes=[
            pltpu.VMEM((tq_e, num_heads), jnp.float32),      # running max  m
            pltpu.VMEM((tq_e, num_heads), jnp.float32),      # running sum  l
            pltpu.VMEM((num_heads, tq_e, D), jnp.float32),   # unnormalized ctx
        ],
        compiler_params=pltpu.CompilerParams(
            dimension_semantics=("parallel", "parallel", "arbitrary"),
            vmem_limit_bytes=_VMEM_CAP),
    )(q, k, v)
    return out if Lq_pad == Lq else out[:, :Lq]


# ---------------------------------------------------------------------------
# Full MultiHeadAttention forward
# ---------------------------------------------------------------------------
def multi_head_attention(query, key, value, params, num_heads, *,
                         mask=None, mxu_dtype=None):
    """query: (B, Lq, E); key/value: (B, Lk, E). Returns (B, Lq, E)."""
    if mask is not None:
        # TODO(synk): additive/boolean mask (masked_fill) not wired into the
        # flash kernel; the module's default path uses mask=None.
        raise NotImplementedError("mask is not supported by the Pallas kernels")

    B, Lq, E = query.shape
    Lk = key.shape[1]
    assert E % num_heads == 0
    D = E // num_heads
    scale = 1.0 / math.sqrt(D)
    out_dtype = query.dtype

    def cast(a):
        return a.astype(mxu_dtype) if mxu_dtype is not None else a

    # 1/sqrt(D) folded into the Q projection; weights/activations cast to the
    # MXU dtype ONCE here (projection outputs are emitted in that dtype so the
    # attention kernel reads them with zero in-kernel casts).
    wq, bq = cast(params["wq"] * scale), params["bq"] * scale
    wk, bk = cast(params["wk"]), params["bk"]
    wv, bv = cast(params["wv"]), params["bv"]
    wo, bo = cast(params["wo"]), params["bo"]
    act_dtype = wq.dtype

    xq = cast(query.reshape(B * Lq, E))
    if query is key and key is value:
        # Self-attention: ONE matmul against W_qkv (E, 3E); x is read once.
        w_qkv = jnp.concatenate([wq, wk, wv], axis=1)
        b_qkv = jnp.concatenate([bq, bk, bv])
        qkv = pallas_linear(xq, w_qkv, b_qkv, out_dtype=act_dtype)   # (B*Lq, 3E)
        q, k, v = qkv[:, :E], qkv[:, E:2 * E], qkv[:, 2 * E:]
    else:
        q = pallas_linear(xq, wq, bq, out_dtype=act_dtype)
        xk = cast(key.reshape(B * Lk, E))
        if key is value:
            w_kv = jnp.concatenate([wk, wv], axis=1)
            b_kv = jnp.concatenate([bk, bv])
            kv = pallas_linear(xk, w_kv, b_kv, out_dtype=act_dtype)
            k, v = kv[:, :E], kv[:, E:]
        else:
            xv = cast(value.reshape(B * Lk, E))
            k = pallas_linear(xk, wk, bk, out_dtype=act_dtype)
            v = pallas_linear(xv, wv, bv, out_dtype=act_dtype)

    q = q.reshape(B, Lq, E)
    k = k.reshape(B, Lk, E)
    v = v.reshape(B, Lk, E)

    # Flash attention; heads stay packed in the lane dimension, so there are
    # no (B,S,H,D) <-> (B,H,S,D) transposes between kernels.
    ctx = pallas_flash_mha(q, k, v, num_heads)                        # (B, Lq, E)

    out = pallas_linear(ctx.reshape(B * Lq, E), wo, bo, out_dtype=out_dtype)
    return out.reshape(B, Lq, E)


# ---------------------------------------------------------------------------
# Pure-JAX reference (mirrors the PyTorch forward exactly)
# ---------------------------------------------------------------------------
def reference_mha(query, key, value, params, num_heads):
    B, Lq, E = query.shape
    Lk = key.shape[1]
    D = E // num_heads

    q = query @ params["wq"] + params["bq"]
    k = key @ params["wk"] + params["bk"]
    v = value @ params["wv"] + params["bv"]
    q = q.reshape(B, Lq, num_heads, D).transpose(0, 2, 1, 3)
    k = k.reshape(B, Lk, num_heads, D).transpose(0, 2, 1, 3)
    v = v.reshape(B, Lk, num_heads, D).transpose(0, 2, 1, 3)
    scores = jnp.einsum("bhqd,bhkd->bhqk", q, k) / jnp.sqrt(jnp.float32(D))
    attn = jax.nn.softmax(scores, axis=-1)
    ctx = jnp.einsum("bhqk,bhkd->bhqd", attn, v)
    ctx = ctx.transpose(0, 2, 1, 3).reshape(B, Lq, E)
    return ctx @ params["wo"] + params["bo"]


if __name__ == "__main__":
    B, S, E, H = 2, 8, 32, 4

    root = jax.random.PRNGKey(0)
    keys = jax.random.split(root, 16)

    def init_linear(kw, kb, fan_in, fan_out):
        bound = 1.0 / math.sqrt(fan_in)
        w = jax.random.uniform(kw, (fan_in, fan_out), jnp.float32, -bound, bound)
        b = jax.random.uniform(kb, (fan_out,), jnp.float32, -bound, bound)
        return w, b

    wq, bq = init_linear(keys[0], keys[1], E, E)
    wk, bk = init_linear(keys[2], keys[3], E, E)
    wv, bv = init_linear(keys[4], keys[5], E, E)
    wo, bo = init_linear(keys[6], keys[7], E, E)
    params = dict(wq=wq, bq=bq, wk=wk, bk=bk, wv=wv, bv=bv, wo=wo, bo=bo)

    def check(out, ref, name):
        out = jax.block_until_ready(out)
        assert out.shape == ref.shape, (name, out.shape, ref.shape)
        err = float(jnp.max(jnp.abs(out - ref)))
        assert jnp.allclose(out, ref, atol=2e-4, rtol=2e-4), f"{name}: max err {err}"

    # 1) self-attention (fused W_qkv path)
    x = jax.random.normal(keys[8], (B, S, E), jnp.float32)
    check(multi_head_attention(x, x, x, params, H),
          reference_mha(x, x, x, params, H), "self")

    # 2) cross-attention (separate projections, Lq != Lk)
    q_in = jax.random.normal(keys[9], (B, S, E), jnp.float32)
    k_in = jax.random.normal(keys[10], (B, 2 * S, E), jnp.float32)
    v_in = jax.random.normal(keys[11], (B, 2 * S, E), jnp.float32)
    check(multi_head_attention(q_in, k_in, v_in, params, H),
          reference_mha(q_in, k_in, v_in, params, H), "cross")

    # 3) ragged sequence length (exercises the seq-padding + kv-masking path)
    x_r = jax.random.normal(keys[12], (1, 300, E), jnp.float32)
    check(multi_head_attention(x_r, x_r, x_r, params, H),
          reference_mha(x_r, x_r, x_r, params, H), "ragged")

    print("KERNEL_OK")
</pallas_src>

<mosaic_0001>
module attributes {stable_mosaic.version = 11 : i64} {
  func.func @_linear_ws_kernel(%arg0: i32, %arg1: memref<16x32xf32, #tpu.memory_space<vmem>>, %arg2: memref<32x96xf32, #tpu.memory_space<vmem>>, %arg3: memref<1x96xf32, #tpu.memory_space<vmem>>, %arg4: memref<16x96xf32, #tpu.memory_space<vmem>>) attributes {dimension_semantics = [#tpu.dimension_semantics<parallel>], iteration_bounds = array<i64: 1>, scalar_prefetch = 0 : i64, scratch_operands = 0 : i64, tpu.core_type = #tpu.core_type<tc>, window_params = [{transform_indices = @transform_0, window_bounds = array<i64: 16, 32>}, {pipeline_mode = #tpu.pipeline_mode<synchronous>, transform_indices = @transform_1, window_bounds = array<i64: 32, 96>}, {pipeline_mode = #tpu.pipeline_mode<synchronous>, transform_indices = @transform_2, window_bounds = array<i64: 1, 96>}, {transform_indices = @transform_3, window_bounds = array<i64: 16, 96>}]} {
    %c0 = arith.constant 0 : index
    %c0_0 = arith.constant 0 : index
    %0 = vector.load %arg1[%c0, %c0_0] : memref<16x32xf32, #tpu.memory_space<vmem>>, vector<16x32xf32>
    %c0_1 = arith.constant 0 : index
    %c0_2 = arith.constant 0 : index
    %1 = vector.load %arg2[%c0_1, %c0_2] : memref<32x96xf32, #tpu.memory_space<vmem>>, vector<32x96xf32>
    %cst = arith.constant dense<0.000000e+00> : vector<16x96xf32>
    %2 = tpu.matmul %0, %1, %cst {dimension_numbers = #tpu.dot_dimension_numbers<[1], [0], [0], [1], [0, 0, 1, 1], [], []>} : vector<16x32xf32>, vector<32x96xf32>, vector<16x96xf32> -> vector<16x96xf32>
    %c0_3 = arith.constant 0 : index
    %c0_4 = arith.constant 0 : index
    %3 = vector.load %arg3[%c0_3, %c0_4] : memref<1x96xf32, #tpu.memory_space<vmem>>, vector<1x96xf32>
    %4 = vector.broadcast %3 : vector<1x96xf32> to vector<16x96xf32>
    %5 = arith.addf %2, %4 : vector<16x96xf32>
    %c0_5 = arith.constant 0 : index
    %c0_6 = arith.constant 0 : index
    %6 = vector.load %arg4[%c0_5, %c0_6] : memref<16x96xf32, #tpu.memory_space<vmem>>, vector<16x96xf32>
    tpu.vector_store %arg4[%c0_5, %c0_6], %5 {strides = array<i32>} : memref<16x96xf32, #tpu.memory_space<vmem>>, vector<16x96xf32>,
    return
  }
  func.func @transform_0(%arg0: i32) -> (i32, i32) {
    %c0_i32 = arith.constant 0 : i32
    %c0_i32_0 = arith.constant 0 : i32
    return %arg0, %c0_i32 : i32, i32
  }
  func.func @transform_1(%arg0: i32) -> (i32, i32) {
    %c0_i32 = arith.constant 0 : i32
    %c0_i32_0 = arith.constant 0 : i32
    %c0_i32_1 = arith.constant 0 : i32
    return %c0_i32, %c0_i32_0 : i32, i32
  }
  func.func @transform_2(%arg0: i32) -> (i32, i32) {
    %c0_i32 = arith.constant 0 : i32
    %c0_i32_0 = arith.constant 0 : i32
    %c0_i32_1 = arith.constant 0 : i32
    return %c0_i32, %c0_i32_0 : i32, i32
  }
  func.func @transform_3(%arg0: i32) -> (i32, i32) {
    %c0_i32 = arith.constant 0 : i32
    %c0_i32_0 = arith.constant 0 : i32
    return %arg0, %c0_i32 : i32, i32
  }
}

</mosaic_0001>

<llo_original>
// kernel: tpu_custom_call.1
$region0: #{tpu_custom_call.1}
  #allocation0 [shape = 'u32[]', space=smem, size = 0x4, offset = 0x4, fixed_abs, tag = 'smem constant byte address 0x4 - core index']
  #allocation1 [shape = 'u32[144,128]{1,0:T(1,128)}', space=vmem, size = 0x12000, scoped, tag = 'internal scratch']
  %s0 = inlined_call_operand.hbm [shape: f32[16,32], index: 0, kind: input, shape index: {}]
  %s1 = inlined_call_operand.hbm [shape: f32[32,96], index: 1, kind: input, shape index: {}]
  %s2 = inlined_call_operand.vmem [shape: f32[1,96], index: 2, kind: input, shape index: {}]
  %s3 = inlined_call_operand.hbm [shape: f32[16,96], index: 3, kind: output, shape index: {}]
  %s4 = sld [smem:[#allocation0]]
  $region30: #{tpu_custom_call.1} parent=0
    _
  %s6 = ssub.s32 1, %s4
  %s7 = scalar_select 0, %s6, %s4
  $region1: #{tpu_custom_call.1} parent=0
    #allocation2 [shape = 'u8[8192]{0}', space=vmem, size = 0x2000, scoped, tag = 'input window, operand 0, single buffered']
    #allocation3 [shape = 's32[1]{0}', space=sflag, size = 0x4, scoped, tag = 'scoped memory for tpu_custom_call.1']
    #allocation4 [shape = 's32[1]{0}', space=sflag, size = 0x4, scoped, tag = 'scoped memory for tpu_custom_call.1']
    #allocation5 [shape = 'u8[16384]{0}', space=vmem, size = 0x4000, scoped, tag = 'input window, operand 1, single buffered']
    #allocation6 [shape = 's32[1]{0}', space=sflag, size = 0x4, scoped, tag = 'scoped memory for tpu_custom_call.1']
    #allocation7 [shape = 'u8[8192]{0}', space=vmem, size = 0x2000, scoped, tag = 'output window, operand 0, single buffered']
    %8 = vsyncpa [#allocation3], 0
    %9 = vsyncpa [#allocation6], 0
    %10 = vsyncpa [#allocation4], 0
    // Predicated region
    $region2: #{tpu_custom_call.1} parent=1 // pred_check
      _
    $region3: #{tpu_custom_call.1} parent=1 // pred_check_branch
      %12 = sbr.rel (0) target = $region5
    $region4: #{tpu_custom_call.1} parent=1 // pred_region
      %s14 = ssub.s32 256, 256
      %15 = vsyncadd [#allocation3], %s14
      %s16 = sshll.u32 [#allocation2], 4
      %s17 = int_to_ptr.vmem [resolvable:$true] %s16
      %22 = dma.hbm_to_vmem [thread:$0]  %s0, 256, %s17, [#allocation3], 128, 128, 8
    $region5: #{tpu_custom_call.1} parent=1 // pred_fallthru
      _
    // Predicated region
    $region6: #{tpu_custom_call.1} parent=1 // pred_check
      _
    $region7: #{tpu_custom_call.1} parent=1 // pred_check_branch
      %24 = sbr.rel (0) target = $region9
    $region8: #{tpu_custom_call.1} parent=1 // pred_region
      %s26 = ssub.s32 512, 512
      %27 = vsyncadd [#allocation6], %s26
      %s28 = sshll.u32 [#allocation5], 4
      %s29 = int_to_ptr.vmem [resolvable:$true] %s28
      %34 = dma.hbm_to_vmem [thread:$0]  %s1, 512, %s29, [#allocation6], 128, 128, 8
    $region9: #{tpu_custom_call.1} parent=1 // pred_fallthru
      _
    // Predicated region
    $region10: #{tpu_custom_call.1} parent=1 // pred_check
      _
    $region11: #{tpu_custom_call.1} parent=1 // pred_check_branch
      %36 = sbr.rel (0) target = $region13
    $region12: #{tpu_custom_call.1} parent=1 // pred_region
      _
    $region13: #{tpu_custom_call.1} parent=1 // pred_fallthru
      _
    // Predicated region
    $region14: #{tpu_custom_call.1} parent=1 // pred_check
      _
    $region15: #{tpu_custom_call.1} parent=1 // pred_check_branch
      %38 = sbr.rel (0) target = $region17
    $region16: #{tpu_custom_call.1} parent=1 // pred_region
      %39 = dma.done [#allocation3], 256
    $region17: #{tpu_custom_call.1} parent=1 // pred_fallthru
      _
    // Predicated region
    $region18: #{tpu_custom_call.1} parent=1 // pred_check
      _
    $region19: #{tpu_custom_call.1} parent=1 // pred_check_branch
      %41 = sbr.rel (0) target = $region21
    $region20: #{tpu_custom_call.1} parent=1 // pred_region
      %42 = dma.done [#allocation6], 512
    $region21: #{tpu_custom_call.1} parent=1 // pred_fallthru
      _
    %v43 = vld [vmem:[#allocation2] sm:$0xff]
    %v44 = vld [vmem:[#allocation2 + $0x8] sm:$0xff]
    %v45 = vld [vmem:[#allocation5] sm:$0xff]
    %v46 = vld [vmem:[#allocation5 + $0x8] sm:$0xff]
    %v47 = vld [vmem:[#allocation5 + $0x10] sm:$0xff]
    %v48 = vld [vmem:[#allocation5 + $0x18] sm:$0xff]
    %v49 = vld [vmem:[%s2] sm:$0x1]
    %v51 = vlaneseq
    %v52 = vshrl.u32 %v51, 7
    %v53 = vsub.s32 0, %v52
    %v54 = vrot.slane %v49, %v53
    %vm56 = vcmask 261120
    %v58 = vsel %vm56, %v43, 0
    %v61 = vsel %vm56, %v44, 0
    %63 = vmatprep.subr.mxu0 0.0
    %64 = vmatpush1.msra.mxu0 %v45
    %65 = vmatprep.subr.mxu0 0.0
    %66 = vmatpush1.msra.mxu0 %v46
    %67 = vmatprep.subr.mxu0 0.0
    %68 = vmatpush1.msra.mxu0 %v47
    %69 = vmatprep.subr.mxu0 0.0
    %70 = vmatpush1.msra.mxu0 %v48
    %71 = vmatprep.subr.mxu0 0.0
    %72 = vmatpush1.msra.mxu0 0.0
    %73 = vmatprep.subr.mxu0 0.0
    %74 = vmatpush1.msra.mxu0 0.0
    %75 = vmatprep.subr.mxu0 0.0
    %76 = vmatpush1.msra.mxu0 0.0
    %77 = vmatprep.subr.mxu0 0.0
    %78 = vmatpush1.msra.mxu0 0.0
    %79 = vmatprep.subr.mxu0 0.0
    %80 = vmatpush1.msra.mxu0 0.0
    %81 = vmatprep.subr.mxu0 0.0
    %82 = vmatpush1.msra.mxu0 0.0
    %83 = vmatprep.subr.mxu0 0.0
    %84 = vmatpush1.msra.mxu0 0.0
    %85 = vmatprep.subr.mxu0 0.0
    %86 = vmatpush1.msra.mxu0 0.0
    %87 = vmatprep.subr.mxu0 0.0
    %88 = vmatpush1.msra.mxu0 0.0
    %89 = vmatprep.subr.mxu0 0.0
    %90 = vmatpush1.msra.mxu0 0.0
    %91 = vmatprep.subr.mxu0 0.0
    %92 = vmatpush1.msra.mxu0 0.0
    %93 = vmatprep.subr.mxu0 0.0
    %94 = vmatpush1.msra.mxu0 0.0
    %95 = vmatprep.subr.mxu0 0.0
    %96 = vmatpush1.msra.mxu0 0.0
    %97 = vmatprep.subr.mxu0 0.0
    %98 = vmatpush1.msra.mxu0 0.0
    %99 = vmatprep.subr.mxu0 0.0
    %100 = vmatpush1.msra.mxu0 0.0
    %101 = vmatprep.subr.mxu0 0.0
    %102 = vmatpush1.msra.mxu0 0.0
    %103 = vmatprep.subr.mxu0 0.0
    %104 = vmatpush1.msra.mxu0 0.0
    %105 = vmatprep.subr.mxu0 0.0
    %106 = vmatpush1.msra.mxu0 0.0
    %107 = vmatprep.subr.mxu0 0.0
    %108 = vmatpush1.msra.mxu0 0.0
    %109 = vmatprep.subr.mxu0 0.0
    %110 = vmatpush1.msra.mxu0 0.0
    %111 = vmatprep.subr.mxu0 0.0
    %112 = vmatpush1.msra.mxu0 0.0
    %113 = vmatprep.subr.mxu0 0.0
    %114 = vmatpush1.msra.mxu0 0.0
    %115 = vmatprep.subr.mxu0 0.0
    %116 = vmatpush1.msra.mxu0 0.0
    %117 = vmatprep.subr.mxu0 0.0
    %118 = vmatpush1.msra.mxu0 0.0
    %119 = vmatprep.subr.mxu0 0.0
    %120 = vmatpush1.msra.mxu0 0.0
    %121 = vmatprep.subr.mxu0 0.0
    %122 = vmatpush1.msra.mxu0 0.0
    %123 = vmatprep.subr.mxu0 0.0
    %124 = vmatpush1.msra.mxu0 0.0
    %125 = vmatprep.subr.mxu0 0.0
    %126 = vmatpush1.msra.mxu0 0.0
    %127 = vmatprep.mubr.f32.mxu0 0.0
    %128 = vmatmul.mubr.f32.gmra.mrb[0].mxu0 %v58
    %v129 = vpop.f32.mrb[0].mxu0
    %v130 = vadd.f32 %v54, %v129
    %v131 = vpop.f32.mrb[0].mxu0
    %132 = vmatprep.mubr.f32.mxu0 0.0
    %133 = vmatmul.mubr.f32.gmra.mrb[0].mxu0 %v61
    %v134 = vpop.f32.mrb[0].mxu0
    %v135 = vadd.f32 %v54, %v134
    %v136 = vpop.f32.mrb[0].mxu0
    %137 = vdwg.mxu0
    %vm138 = vcmask 785408
    %139 = vst.msk [vmem:[#allocation7] sm:$0xff] %vm138, %v130
    %140 = vst.msk [vmem:[#allocation7 + $0x8] sm:$0xff] %vm138, %v135
    // Predicated region
    $region22: #{tpu_custom_call.1} parent=1 // pred_check
      _
    $region23: #{tpu_custom_call.1} parent=1 // pred_check_branch
      %142 = sbr.rel (0) target = $region25
    $region24: #{tpu_custom_call.1} parent=1 // pred_region
      %s144 = ssub.s32 256, 256
      %145 = vsyncadd [#allocation4], %s144
      %s146 = sshll.u32 [#allocation7], 4
      %s147 = int_to_ptr.vmem [resolvable:$true] %s146
      %152 = dma.vmem_to_hbm [thread:$0]  %s147, 256, %s3, [#allocation4], 128, 128, 8
    $region25: #{tpu_custom_call.1} parent=1 // pred_fallthru
      _
    // Predicated region
    $region26: #{tpu_custom_call.1} parent=1 // pred_check
      _
    $region27: #{tpu_custom_call.1} parent=1 // pred_check_branch
      %154 = sbr.rel (0) target = $region29
    $region28: #{tpu_custom_call.1} parent=1 // pred_region
      %155 = dma.done [#allocation4], 256
    $region29: #{tpu_custom_call.1} parent=1 // pred_fallthru
      _
    %156 = vsyncpa [#allocation3], 1
    %157 = vsyncpa [#allocation6], 1
    %158 = vsyncpa [#allocation4], 1

</llo_original>
